<compile_context>
chip_gen: v7x
topology: tpu7x:2x2x1
jax: 0.10.0
libtpu: 0.0.40
codegen_flags: <defaults>
</compile_context>

<pallas_src>
import functools
import numpy as np
import jax
import jax.numpy as jnp
from jax.experimental import pallas as pl
from jax.experimental.pallas import tpu as pltpu


def _round_up(x, m):
    return (x + m - 1) // m * m


# ----------------------------- Pallas kernel --------------------------------
def _bottleneck_kernel(x_ref, xr_ref, w1_ref, w2_ref, b_ref, o_ref, *, gpb, gp):
    # x_ref : (tm, F)        bf16  batch tile (group-block invariant)
    # xr_ref: (tm, gpb*gp)   f32   residual slice of x in this block's lane layout
    # w1_ref: (F, gpb*gp)    bf16  layer-1 columns of all groups in this block
    # w2_ref: (gpb, gp, gp)  bf16  layer-2 per-group square blocks
    # b_ref : (2, gpb*gp)    f32   row 0 = b1, row 1 = b2
    # o_ref : (tm, gpb*gp)   f32   this block's output lanes
    x = x_ref[...]

    # Layer 1 for ALL groups of this block as one wide MXU matmul (N = gpb*gp),
    # f32 accumulation, bias + ReLU on the VPU.
    h = jnp.dot(x, w1_ref[...], preferred_element_type=jnp.float32)
    h = jnp.maximum(h + b_ref[0:1, :], 0.0)

    # Layer 2: one small (tm, gp) x (gp, gp) matmul per group.  gp is a multiple
    # of 128, so every slice and store below is lane-aligned / lane-dense.
    for g in range(gpb):
        sl = slice(g * gp, (g + 1) * gp)
        y = jnp.dot(h[:, sl].astype(jnp.bfloat16), w2_ref[g],
                    preferred_element_type=jnp.float32)
        y = jnp.maximum(y + b_ref[1:2, sl], 0.0)
        # residual: padding lanes are 0 (zero weights/bias) + 0 (zero residual).
        o_ref[:, sl] = (y + xr_ref[:, sl]).astype(o_ref.dtype)


# ------------------------------ tiling choice --------------------------------
def _choose_tiling(B, F, G, gp, *, block_batch=512, vmem_budget=40 << 20):
    """Pick (batch tile, groups per block) against a v7x-safe VMEM budget."""
    def vmem_bytes(tm, gpb):
        gw = gpb * gp
        return 2 * (tm * F * 2          # x tile, bf16, double-buffered
                    + tm * gw * 4       # residual tile, f32
                    + F * gw * 2        # W1 block, bf16
                    + gpb * gp * gp * 2 # W2 block, bf16
                    + 2 * gw * 4        # fused biases, f32
                    + tm * gw * 4)      # output tile, f32

    divisors = sorted((d for d in range(1, G + 1) if G % d == 0), reverse=True)
    tm0 = min(_round_up(B, 8), block_batch)
    for gpb in divisors:                # prefer fully collapsing the group axis
        tm = tm0
        while tm > 8 and vmem_bytes(tm, gpb) > vmem_budget:
            tm = _round_up(max(8, tm // 2), 8)
        if vmem_bytes(tm, gpb) <= vmem_budget:
            return tm, gpb
    return 8, 1


# -------------------------------- forward ------------------------------------
def bottleneck_forward(x, w1, w2, bias, group_sizes, gp, *, block_batch=512):
    """x: (B, F) f32; w1: (F, G*gp) bf16; w2: (G, gp, gp) bf16; bias: (2, G*gp) f32."""
    B, F = x.shape
    G = len(group_sizes)
    assert w1.shape == (F, G * gp)
    assert w2.shape == (G, gp, gp)
    assert bias.shape == (2, G * gp)

    tm, gpb = _choose_tiling(B, F, G, gp, block_batch=block_batch)
    b_pad = _round_up(B, tm)
    x_p = x if b_pad == B else jnp.pad(x, ((0, b_pad - B), (0, 0)))
    x_bf = x_p.astype(jnp.bfloat16)                 # matmul operand (bf16 stream)

    # Residual slab: group g's columns of x land at lanes [g*gp, g*gp+gs_g).
    aligned = all(gs == gp for gs in group_sizes)
    if aligned:
        x_res = x_p                                  # fast path: layouts coincide
    else:
        parts, off = [], 0
        for gs in group_sizes:
            parts.append(jnp.pad(x_p[:, off:off + gs], ((0, 0), (0, gp - gs))))
            off += gs
        x_res = jnp.concatenate(parts, axis=1)       # (b_pad, G*gp) f32

    n_bt = b_pad // tm
    grid = (n_bt, G // gpb)
    gw = gpb * gp

    flops = 2 * b_pad * F * G * gp + 2 * b_pad * G * gp * gp
    bytes_accessed = (x_bf.size * 2 + x_res.size * 4 + b_pad * G * gp * 4
                      + n_bt * (w1.size * 2 + w2.size * 2 + bias.size * 4))

    out = pl.pallas_call(
        functools.partial(_bottleneck_kernel, gpb=gpb, gp=gp),
        out_shape=jax.ShapeDtypeStruct((b_pad, G * gp), jnp.float32),
        grid=grid,
        in_specs=[
            pl.BlockSpec((tm, F), lambda i, gb: (i, 0)),            # x tile (bf16)
            pl.BlockSpec((tm, gw), lambda i, gb: (i, gb)),          # residual (f32)
            pl.BlockSpec((F, gw), lambda i, gb: (0, gb)),           # W1 column block
            pl.BlockSpec((gpb, gp, gp), lambda i, gb: (gb, 0, 0)),  # W2 blocks
            pl.BlockSpec((2, gw), lambda i, gb: (0, gb)),           # fused biases
        ],
        out_specs=pl.BlockSpec((tm, gw), lambda i, gb: (i, gb)),
        compiler_params=pltpu.CompilerParams(
            dimension_semantics=("parallel", "parallel"),
            vmem_limit_bytes=48 * 1024 * 1024,
        ),
        cost_estimate=pl.CostEstimate(flops=int(flops), transcendentals=0,
                                      bytes_accessed=int(bytes_accessed)),
    )(x_bf, x_res, w1, w2, bias)

    if aligned:
        return out[:B]
    outs = [out[:B, g * gp:g * gp + gs] for g, gs in enumerate(group_sizes)]
    return jnp.concatenate(outs, axis=1)


# --------------------------- parameter packing ------------------------------
def build_bottleneck_params(key, in_features, n_groups, weight_dtype=jnp.bfloat16):
    """Build per-group Linear params (torch grouping) and pack them for the kernel."""
    size, rest = divmod(in_features, n_groups)
    group_sizes = [size] * n_groups + ([rest] if rest != 0 else [])
    G = len(group_sizes)
    gp = max(128, _round_up(max(group_sizes), 128))   # lane-dense per-group width

    per_group = []
    w1 = np.zeros((in_features, G * gp), np.float32)
    w2 = np.zeros((G, gp, gp), np.float32)
    bias = np.zeros((2, G * gp), np.float32)          # row 0 = b1, row 1 = b2
    for g, gs in enumerate(group_sizes):
        key, k1, k2, k3, k4 = jax.random.split(key, 5)
        # torch nn.Linear(in, out) weight is (out, in); stored transposed (in, out)
        w1_g = np.asarray(jax.random.normal(k1, (in_features, gs)) * 0.1, np.float32)
        b1_g = np.asarray(jax.random.normal(k2, (gs,)) * 0.1, np.float32)
        w2_g = np.asarray(jax.random.normal(k3, (gs, gs)) * 0.1, np.float32)
        b2_g = np.asarray(jax.random.normal(k4, (gs,)) * 0.1, np.float32)
        per_group.append((w1_g, b1_g, w2_g, b2_g))
        w1[:, g * gp:g * gp + gs] = w1_g
        w2[g, :gs, :gs] = w2_g
        bias[0, g * gp:g * gp + gs] = b1_g
        bias[1, g * gp:g * gp + gs] = b2_g

    packed = dict(
        w1=jnp.asarray(w1, weight_dtype),     # (F, G*gp)   bf16
        w2=jnp.asarray(w2, weight_dtype),     # (G, gp, gp) bf16
        bias=jnp.asarray(bias, jnp.float32),  # (2, G*gp)   f32
        group_sizes=tuple(group_sizes),
        gp=gp,
    )
    return packed, per_group


# ----------------------- pure-JAX reference (per-group) ---------------------
def bottleneck_reference(x, per_group, in_features, emulate_bf16=True):
    act = lambda v: jnp.maximum(v, 0.0)
    if emulate_bf16:
        q = lambda a: jnp.asarray(a, jnp.float32).astype(jnp.bfloat16).astype(jnp.float32)
    else:
        q = lambda a: jnp.asarray(a, jnp.float32)
    outs = []
    for (w1_g, b1_g, w2_g, b2_g) in per_group:
        h = act(q(x) @ q(w1_g) + b1_g)
        h = act(q(h) @ q(w2_g) + b2_g)
        outs.append(h)
    out = jnp.concatenate(outs, axis=1)
    return out + x[:, :in_features]


# --------------------------------- main --------------------------------------
if __name__ == "__main__":
    key = jax.random.PRNGKey(0)
    batch = 8
    in_features = 32
    n_groups = 3          # 32 = 3*10 + 2  -> exercises the residual ("rest") group

    key, kx, kp = jax.random.split(key, 3)
    x = jax.random.normal(kx, (batch, in_features), dtype=jnp.float32)

    packed, per_group = build_bottleneck_params(kp, in_features, n_groups)

    out = bottleneck_forward(x, packed["w1"], packed["w2"], packed["bias"],
                             packed["group_sizes"], packed["gp"])
    out = jax.block_until_ready(out)

    # Tight check vs a reference applying the same bf16 weight/activation rounding
    # the kernel uses on the MXU (f32 accumulation, f32 bias/residual).
    ref_q = bottleneck_reference(x, per_group, in_features, emulate_bf16=True)
    np.testing.assert_allclose(np.asarray(out), np.asarray(ref_q), rtol=1e-3, atol=1e-3)

    # Loose check vs the pure-f32 PyTorch-equivalent math (bf16 quantization noise only).
    ref_f32 = bottleneck_reference(x, per_group, in_features, emulate_bf16=False)
    np.testing.assert_allclose(np.asarray(out), np.asarray(ref_f32), rtol=3e-2, atol=3e-2)

    print("KERNEL_OK")
</pallas_src>

<mosaic_0001>
module attributes {stable_mosaic.version = 11 : i64} {
  func.func @_bottleneck_kernel(%arg0: i32, %arg1: i32, %arg2: memref<8x32xbf16, #tpu.memory_space<vmem>>, %arg3: memref<8x512xf32, #tpu.memory_space<vmem>>, %arg4: memref<32x512xbf16, #tpu.memory_space<vmem>>, %arg5: memref<4x128x128xbf16, #tpu.memory_space<vmem>>, %arg6: memref<2x512xf32, #tpu.memory_space<vmem>>, %arg7: memref<8x512xf32, #tpu.memory_space<vmem>>) attributes {dimension_semantics = [#tpu.dimension_semantics<parallel>, #tpu.dimension_semantics<parallel>], iteration_bounds = array<i64: 1, 1>, scalar_prefetch = 0 : i64, scratch_operands = 0 : i64, tpu.core_type = #tpu.core_type<tc>, window_params = [{transform_indices = @transform_0, window_bounds = array<i64: 8, 32>}, {transform_indices = @transform_1, window_bounds = array<i64: 8, 512>}, {transform_indices = @transform_2, window_bounds = array<i64: 32, 512>}, {transform_indices = @transform_3, window_bounds = array<i64: 4, 128, 128>}, {transform_indices = @transform_4, window_bounds = array<i64: 2, 512>}, {transform_indices = @transform_5, window_bounds = array<i64: 8, 512>}]} {
    %c0 = arith.constant 0 : index
    %c0_0 = arith.constant 0 : index
    %0 = vector.load %arg2[%c0, %c0_0] : memref<8x32xbf16, #tpu.memory_space<vmem>>, vector<8x32xbf16>
    %c0_1 = arith.constant 0 : index
    %c0_2 = arith.constant 0 : index
    %1 = vector.load %arg4[%c0_1, %c0_2] : memref<32x512xbf16, #tpu.memory_space<vmem>>, vector<32x512xbf16>
    %cst = arith.constant dense<0.000000e+00> : vector<8x512xf32>
    %2 = tpu.matmul %0, %1, %cst {dimension_numbers = #tpu.dot_dimension_numbers<[1], [0], [0], [1], [0, 0, 1, 1], [], []>} : vector<8x32xbf16>, vector<32x512xbf16>, vector<8x512xf32> -> vector<8x512xf32>
    %c0_3 = arith.constant 0 : index
    %c0_4 = arith.constant 0 : index
    %3 = vector.load %arg6[%c0_3, %c0_4] : memref<2x512xf32, #tpu.memory_space<vmem>>, vector<1x512xf32>
    %4 = vector.broadcast %3 : vector<1x512xf32> to vector<8x512xf32>
    %5 = arith.addf %2, %4 : vector<8x512xf32>
    %cst_5 = arith.constant 0.000000e+00 : f32
    %6 = vector.broadcast %cst_5 : f32 to vector<8x512xf32>
    %7 = arith.maximumf %5, %6 : vector<8x512xf32>
    %8 = vector.extract_strided_slice %7 {offsets = [0, 0], sizes = [8, 128], strides = [1, 1]} : vector<8x512xf32> to vector<8x128xf32>
    %9 = arith.truncf %8 : vector<8x128xf32> to vector<8x128xbf16>
    %c0_6 = arith.constant 0 : index
    %c0_7 = arith.constant 0 : index
    %c0_8 = arith.constant 0 : index
    %10 = vector.load %arg5[%c0_6, %c0_7, %c0_8] : memref<4x128x128xbf16, #tpu.memory_space<vmem>>, vector<1x128x128xbf16>
    %11 = vector.shape_cast %10 : vector<1x128x128xbf16> to vector<128x128xbf16>
    %cst_9 = arith.constant dense<0.000000e+00> : vector<8x128xf32>
    %12 = tpu.matmul %9, %11, %cst_9 {dimension_numbers = #tpu.dot_dimension_numbers<[1], [0], [0], [1], [0, 0, 1, 1], [], []>} : vector<8x128xbf16>, vector<128x128xbf16>, vector<8x128xf32> -> vector<8x128xf32>
    %c1 = arith.constant 1 : index
    %c0_10 = arith.constant 0 : index
    %13 = vector.load %arg6[%c1, %c0_10] : memref<2x512xf32, #tpu.memory_space<vmem>>, vector<1x128xf32>
    %14 = vector.broadcast %13 : vector<1x128xf32> to vector<8x128xf32>
    %15 = arith.addf %12, %14 : vector<8x128xf32>
    %cst_11 = arith.constant 0.000000e+00 : f32
    %16 = vector.broadcast %cst_11 : f32 to vector<8x128xf32>
    %17 = arith.maximumf %15, %16 : vector<8x128xf32>
    %c0_12 = arith.constant 0 : index
    %c0_13 = arith.constant 0 : index
    %18 = vector.load %arg3[%c0_12, %c0_13] : memref<8x512xf32, #tpu.memory_space<vmem>>, vector<8x128xf32>
    %19 = arith.addf %17, %18 : vector<8x128xf32>
    %c0_14 = arith.constant 0 : index
    %c0_15 = arith.constant 0 : index
    %20 = vector.load %arg7[%c0_14, %c0_15] : memref<8x512xf32, #tpu.memory_space<vmem>>, vector<8x128xf32>
    tpu.vector_store %arg7[%c0_14, %c0_15], %19 {strides = array<i32>} : memref<8x512xf32, #tpu.memory_space<vmem>>, vector<8x128xf32>,
    %21 = vector.extract_strided_slice %7 {offsets = [0, 128], sizes = [8, 128], strides = [1, 1]} : vector<8x512xf32> to vector<8x128xf32>
    %22 = arith.truncf %21 : vector<8x128xf32> to vector<8x128xbf16>
    %c1_16 = arith.constant 1 : index
    %c0_17 = arith.constant 0 : index
    %c0_18 = arith.constant 0 : index
    %23 = vector.load %arg5[%c1_16, %c0_17, %c0_18] : memref<4x128x128xbf16, #tpu.memory_space<vmem>>, vector<1x128x128xbf16>
    %24 = vector.shape_cast %23 : vector<1x128x128xbf16> to vector<128x128xbf16>
    %cst_19 = arith.constant dense<0.000000e+00> : vector<8x128xf32>
    %25 = tpu.matmul %22, %24, %cst_19 {dimension_numbers = #tpu.dot_dimension_numbers<[1], [0], [0], [1], [0, 0, 1, 1], [], []>} : vector<8x128xbf16>, vector<128x128xbf16>, vector<8x128xf32> -> vector<8x128xf32>
    %c1_20 = arith.constant 1 : index
    %c128 = arith.constant 128 : index
    %26 = vector.load %arg6[%c1_20, %c128] : memref<2x512xf32, #tpu.memory_space<vmem>>, vector<1x128xf32>
    %27 = vector.broadcast %26 : vector<1x128xf32> to vector<8x128xf32>
    %28 = arith.addf %25, %27 : vector<8x128xf32>
    %cst_21 = arith.constant 0.000000e+00 : f32
    %29 = vector.broadcast %cst_21 : f32 to vector<8x128xf32>
    %30 = arith.maximumf %28, %29 : vector<8x128xf32>
    %c0_22 = arith.constant 0 : index
    %c128_23 = arith.constant 128 : index
    %31 = vector.load %arg3[%c0_22, %c128_23] : memref<8x512xf32, #tpu.memory_space<vmem>>, vector<8x128xf32>
    %32 = arith.addf %30, %31 : vector<8x128xf32>
    %c0_24 = arith.constant 0 : index
    %c128_25 = arith.constant 128 : index
    %33 = vector.load %arg7[%c0_24, %c128_25] : memref<8x512xf32, #tpu.memory_space<vmem>>, vector<8x128xf32>
    tpu.vector_store %arg7[%c0_24, %c128_25], %32 {strides = array<i32>} : memref<8x512xf32, #tpu.memory_space<vmem>>, vector<8x128xf32>,
    %34 = vector.extract_strided_slice %7 {offsets = [0, 256], sizes = [8, 128], strides = [1, 1]} : vector<8x512xf32> to vector<8x128xf32>
    %35 = arith.truncf %34 : vector<8x128xf32> to vector<8x128xbf16>
    %c2 = arith.constant 2 : index
    %c0_26 = arith.constant 0 : index
    %c0_27 = arith.constant 0 : index
    %36 = vector.load %arg5[%c2, %c0_26, %c0_27] : memref<4x128x128xbf16, #tpu.memory_space<vmem>>, vector<1x128x128xbf16>
    %37 = vector.shape_cast %36 : vector<1x128x128xbf16> to vector<128x128xbf16>
    %cst_28 = arith.constant dense<0.000000e+00> : vector<8x128xf32>
    %38 = tpu.matmul %35, %37, %cst_28 {dimension_numbers = #tpu.dot_dimension_numbers<[1], [0], [0], [1], [0, 0, 1, 1], [], []>} : vector<8x128xbf16>, vector<128x128xbf16>, vector<8x128xf32> -> vector<8x128xf32>
    %c1_29 = arith.constant 1 : index
    %c256 = arith.constant 256 : index
    %39 = vector.load %arg6[%c1_29, %c256] : memref<2x512xf32, #tpu.memory_space<vmem>>, vector<1x128xf32>
    %40 = vector.broadcast %39 : vector<1x128xf32> to vector<8x128xf32>
    %41 = arith.addf %38, %40 : vector<8x128xf32>
    %cst_30 = arith.constant 0.000000e+00 : f32
    %42 = vector.broadcast %cst_30 : f32 to vector<8x128xf32>
    %43 = arith.maximumf %41, %42 : vector<8x128xf32>
    %c0_31 = arith.constant 0 : index
    %c256_32 = arith.constant 256 : index
    %44 = vector.load %arg3[%c0_31, %c256_32] : memref<8x512xf32, #tpu.memory_space<vmem>>, vector<8x128xf32>
    %45 = arith.addf %43, %44 : vector<8x128xf32>
    %c0_33 = arith.constant 0 : index
    %c256_34 = arith.constant 256 : index
    %46 = vector.load %arg7[%c0_33, %c256_34] : memref<8x512xf32, #tpu.memory_space<vmem>>, vector<8x128xf32>
    tpu.vector_store %arg7[%c0_33, %c256_34], %45 {strides = array<i32>} : memref<8x512xf32, #tpu.memory_space<vmem>>, vector<8x128xf32>,
    %47 = vector.extract_strided_slice %7 {offsets = [0, 384], sizes = [8, 128], strides = [1, 1]} : vector<8x512xf32> to vector<8x128xf32>
    %48 = arith.truncf %47 : vector<8x128xf32> to vector<8x128xbf16>
    %c3 = arith.constant 3 : index
    %c0_35 = arith.constant 0 : index
    %c0_36 = arith.constant 0 : index
    %49 = vector.load %arg5[%c3, %c0_35, %c0_36] : memref<4x128x128xbf16, #tpu.memory_space<vmem>>, vector<1x128x128xbf16>
    %50 = vector.shape_cast %49 : vector<1x128x128xbf16> to vector<128x128xbf16>
    %cst_37 = arith.constant dense<0.000000e+00> : vector<8x128xf32>
    %51 = tpu.matmul %48, %50, %cst_37 {dimension_numbers = #tpu.dot_dimension_numbers<[1], [0], [0], [1], [0, 0, 1, 1], [], []>} : vector<8x128xbf16>, vector<128x128xbf16>, vector<8x128xf32> -> vector<8x128xf32>
    %c1_38 = arith.constant 1 : index
    %c384 = arith.constant 384 : index
    %52 = vector.load %arg6[%c1_38, %c384] : memref<2x512xf32, #tpu.memory_space<vmem>>, vector<1x128xf32>
    %53 = vector.broadcast %52 : vector<1x128xf32> to vector<8x128xf32>
    %54 = arith.addf %51, %53 : vector<8x128xf32>
    %cst_39 = arith.constant 0.000000e+00 : f32
    %55 = vector.broadcast %cst_39 : f32 to vector<8x128xf32>
    %56 = arith.maximumf %54, %55 : vector<8x128xf32>
    %c0_40 = arith.constant 0 : index
    %c384_41 = arith.constant 384 : index
    %57 = vector.load %arg3[%c0_40, %c384_41] : memref<8x512xf32, #tpu.memory_space<vmem>>, vector<8x128xf32>
    %58 = arith.addf %56, %57 : vector<8x128xf32>
    %c0_42 = arith.constant 0 : index
    %c384_43 = arith.constant 384 : index
    %59 = vector.load %arg7[%c0_42, %c384_43] : memref<8x512xf32, #tpu.memory_space<vmem>>, vector<8x128xf32>
    tpu.vector_store %arg7[%c0_42, %c384_43], %58 {strides = array<i32>} : memref<8x512xf32, #tpu.memory_space<vmem>>, vector<8x128xf32>,
    return
  }
  func.func @transform_0(%arg0: i32, %arg1: i32) -> (i32, i32) {
    %c0_i32 = arith.constant 0 : i32
    %c0_i32_0 = arith.constant 0 : i32
    return %arg0, %c0_i32 : i32, i32
  }
  func.func @transform_1(%arg0: i32, %arg1: i32) -> (i32, i32) {
    %c0_i32 = arith.constant 0 : i32
    return %arg0, %arg1 : i32, i32
  }
  func.func @transform_2(%arg0: i32, %arg1: i32) -> (i32, i32) {
    %c0_i32 = arith.constant 0 : i32
    %c0_i32_0 = arith.constant 0 : i32
    return %c0_i32, %arg1 : i32, i32
  }
  func.func @transform_3(%arg0: i32, %arg1: i32) -> (i32, i32, i32) {
    %c0_i32 = arith.constant 0 : i32
    %c0_i32_0 = arith.constant 0 : i32
    %c0_i32_1 = arith.constant 0 : i32
    return %arg1, %c0_i32, %c0_i32_0 : i32, i32, i32
  }
  func.func @transform_4(%arg0: i32, %arg1: i32) -> (i32, i32) {
    %c0_i32 = arith.constant 0 : i32
    %c0_i32_0 = arith.constant 0 : i32
    return %c0_i32, %arg1 : i32, i32
  }
  func.func @transform_5(%arg0: i32, %arg1: i32) -> (i32, i32) {
    %c0_i32 = arith.constant 0 : i32
    return %arg0, %arg1 : i32, i32
  }
}

</mosaic_0001>

<llo_original>
// kernel: tpu_custom_call.1
$region0: #{tpu_custom_call.1}
  #allocation0 [shape = 'u32[]', space=smem, size = 0x4, offset = 0x4, fixed_abs, tag = 'smem constant byte address 0x4 - core index']
  #allocation1 [shape = 'u32[144,128]{1,0:T(1,128)}', space=vmem, size = 0x12000, scoped, tag = 'internal scratch']
  %s0 = inlined_call_operand.hbm [shape: bf16[8,32], index: 0, kind: input, shape index: {}]
  %s1 = inlined_call_operand.hbm [shape: f32[8,512], index: 1, kind: input, shape index: {}]
  %s2 = inlined_call_operand.hbm [shape: bf16[32,512], index: 2, kind: input, shape index: {}]
  %s3 = inlined_call_operand.hbm [shape: bf16[4,128,128], index: 3, kind: input, shape index: {}]
  %s4 = inlined_call_operand.vmem [shape: f32[2,512], index: 4, kind: input, shape index: {}]
  %s5 = inlined_call_operand.hbm [shape: f32[8,512], index: 5, kind: output, shape index: {}]
  %s6 = sld [smem:[#allocation0]]
  $region46: #{tpu_custom_call.1} parent=0
    _
  %s8 = ssub.s32 1, %s6
  %s9 = scalar_select 0, %s8, %s6
  $region1: #{tpu_custom_call.1} parent=0
    #allocation2 [shape = 'u8[2048]{0}', space=vmem, size = 0x800, scoped, tag = 'input window, operand 0, single buffered']
    #allocation3 [shape = 's32[1]{0}', space=sflag, size = 0x4, scoped, tag = 'scoped memory for tpu_custom_call.1']
    #allocation4 [shape = 's32[1]{0}', space=sflag, size = 0x4, scoped, tag = 'scoped memory for tpu_custom_call.1']
    #allocation5 [shape = 'u8[16384]{0}', space=vmem, size = 0x4000, scoped, tag = 'input window, operand 1, single buffered']
    #allocation6 [shape = 's32[1]{0}', space=sflag, size = 0x4, scoped, tag = 'scoped memory for tpu_custom_call.1']
    #allocation7 [shape = 'u8[32768]{0}', space=vmem, size = 0x8000, scoped, tag = 'input window, operand 2, single buffered']
    #allocation8 [shape = 'u8[131072]{0}', space=vmem, size = 0x20000, scoped, tag = 'input window, operand 3, single buffered']
    #allocation9 [shape = 's32[1]{0}', space=sflag, size = 0x4, scoped, tag = 'scoped memory for tpu_custom_call.1']
    #allocation10 [shape = 'u8[16384]{0}', space=vmem, size = 0x4000, scoped, tag = 'output window, operand 0, single buffered']
    %10 = vsyncpa [#allocation3], 0
    %11 = vsyncpa [#allocation6], 0
    %12 = vsyncpa [#allocation9], 0
    %13 = vsyncpa [#allocation4], 0
    // Predicated region
    $region2: #{tpu_custom_call.1} parent=1 // pred_check
      _
    $region3: #{tpu_custom_call.1} parent=1 // pred_check_branch
      %15 = sbr.rel (0) target = $region5
    $region4: #{tpu_custom_call.1} parent=1 // pred_region
      %s17 = ssub.s32 64, 64
      %18 = vsyncadd [#allocation3], %s17
      %s20 = sshll.u32 [#allocation2], 4
      %s21 = int_to_ptr.vmem [resolvable:$true] %s20
      %23 = dma.hbm_to_vmem [thread:$0]  %s0, 64, %s21, [#allocation3]
    $region5: #{tpu_custom_call.1} parent=1 // pred_fallthru
      _
    // Predicated region
    $region6: #{tpu_custom_call.1} parent=1 // pred_check
      _
    $region7: #{tpu_custom_call.1} parent=1 // pred_check_branch
      %25 = sbr.rel (0) target = $region9
    $region8: #{tpu_custom_call.1} parent=1 // pred_region
      %s27 = ssub.s32 512, 512
      %28 = vsyncadd [#allocation6], %s27
      %s30 = sshll.u32 [#allocation5], 4
      %s31 = int_to_ptr.vmem [resolvable:$true] %s30
      %33 = dma.hbm_to_vmem [thread:$0]  %s1, 512, %s31, [#allocation6]
    $region9: #{tpu_custom_call.1} parent=1 // pred_fallthru
      _
    // Predicated region
    $region10: #{tpu_custom_call.1} parent=1 // pred_check
      _
    $region11: #{tpu_custom_call.1} parent=1 // pred_check_branch
      %35 = sbr.rel (0) target = $region13
    $region12: #{tpu_custom_call.1} parent=1 // pred_region
      %s37 = ssub.s32 1024, 1024
      %38 = vsyncadd [#allocation6], %s37
      %s39 = sshll.u32 [#allocation7], 4
      %s40 = int_to_ptr.vmem [resolvable:$true] %s39
      %45 = dma.hbm_to_vmem [thread:$0]  %s2, 1024, %s40, [#allocation6], 256, 256, 16
    $region13: #{tpu_custom_call.1} parent=1 // pred_fallthru
      _
    // Predicated region
    $region14: #{tpu_custom_call.1} parent=1 // pred_check
      _
    $region15: #{tpu_custom_call.1} parent=1 // pred_check_branch
      %47 = sbr.rel (0) target = $region17
    $region16: #{tpu_custom_call.1} parent=1 // pred_region
      %s49 = ssub.s32 4096, 4096
      %50 = vsyncadd [#allocation9], %s49
      %s51 = sshll.u32 [#allocation8], 4
      %s52 = int_to_ptr.vmem [resolvable:$true] %s51
      %57 = dma.hbm_to_vmem [thread:$0]  %s3, 4096, %s52, [#allocation9], 64, 64, 4
    $region17: #{tpu_custom_call.1} parent=1 // pred_fallthru
      _
    // Predicated region
    $region18: #{tpu_custom_call.1} parent=1 // pred_check
      _
    $region19: #{tpu_custom_call.1} parent=1 // pred_check_branch
      %59 = sbr.rel (0) target = $region21
    $region20: #{tpu_custom_call.1} parent=1 // pred_region
      _
    $region21: #{tpu_custom_call.1} parent=1 // pred_fallthru
      _
    // Predicated region
    $region22: #{tpu_custom_call.1} parent=1 // pred_check
      _
    $region23: #{tpu_custom_call.1} parent=1 // pred_check_branch
      %61 = sbr.rel (0) target = $region25
    $region24: #{tpu_custom_call.1} parent=1 // pred_region
      %62 = dma.done [#allocation3], 64
    $region25: #{tpu_custom_call.1} parent=1 // pred_fallthru
      _
    // Predicated region
    $region26: #{tpu_custom_call.1} parent=1 // pred_check
      _
    $region27: #{tpu_custom_call.1} parent=1 // pred_check_branch
      %64 = sbr.rel (0) target = $region29
    $region28: #{tpu_custom_call.1} parent=1 // pred_region
      %65 = dma.done [#allocation6], 512
    $region29: #{tpu_custom_call.1} parent=1 // pred_fallthru
      _
    // Predicated region
    $region30: #{tpu_custom_call.1} parent=1 // pred_check
      _
    $region31: #{tpu_custom_call.1} parent=1 // pred_check_branch
      %67 = sbr.rel (0) target = $region33
    $region32: #{tpu_custom_call.1} parent=1 // pred_region
      %68 = dma.done [#allocation6], 1024
    $region33: #{tpu_custom_call.1} parent=1 // pred_fallthru
      _
    // Predicated region
    $region34: #{tpu_custom_call.1} parent=1 // pred_check
      _
    $region35: #{tpu_custom_call.1} parent=1 // pred_check_branch
      %70 = sbr.rel (0) target = $region37
    $region36: #{tpu_custom_call.1} parent=1 // pred_region
      %71 = dma.done [#allocation9], 4096
    $region37: #{tpu_custom_call.1} parent=1 // pred_fallthru
      _
    %v73 = vld [vmem:[#allocation2] sm:$0xf]
    %v74 = vld [vmem:[#allocation7] sm:$0xff]
    %v75 = vld [vmem:[#allocation7 + $0x8] sm:$0xff]
    %v76 = vld [vmem:[#allocation7 + $0x10] sm:$0xff]
    %v77 = vld [vmem:[#allocation7 + $0x18] sm:$0xff]
    %v78 = vld [vmem:[#allocation7 + $0x20] sm:$0xff]
    %v79 = vld [vmem:[#allocation7 + $0x28] sm:$0xff]
    %v80 = vld [vmem:[#allocation7 + $0x30] sm:$0xff]
    %v81 = vld [vmem:[#allocation7 + $0x38] sm:$0xff]
    %v82 = vld [vmem:[%s4] ss:$2 sm:$0xf]
    %v84 = vlaneseq
    %v85 = vshrl.u32 %v84, 7
    %v86 = vsub.s32 0, %v85
    %v87 = vrot.slane %v82, %v86
    %v88 = vlaneseq
    %v89 = vshrl.u32 %v88, 7
    %v90 = vsub.s32 1, %v89
    %v91 = vrot.slane %v82, %v90
    %v92 = vlaneseq
    %v93 = vshrl.u32 %v92, 7
    %v94 = vsub.s32 2, %v93
    %v95 = vrot.slane %v82, %v94
    %v96 = vlaneseq
    %v97 = vshrl.u32 %v96, 7
    %v98 = vsub.s32 3, %v97
    %v99 = vrot.slane %v82, %v98
    %v112 = vunpack.c.l.b16 %v74
    %v113 = vunpack.c.h.b16 %v74
    %v114 = vunpack.c.l.b16 %v75
    %v115 = vunpack.c.h.b16 %v75
    %v116 = vunpack.c.l.b16 %v76
    %v117 = vunpack.c.h.b16 %v76
    %v118 = vunpack.c.l.b16 %v77
    %v119 = vunpack.c.h.b16 %v77
    %v120 = vunpack.c.l.b16 %v78
    %v121 = vunpack.c.h.b16 %v78
    %v122 = vunpack.c.l.b16 %v79
    %v123 = vunpack.c.h.b16 %v79
    %v124 = vunpack.c.l.b16 %v80
    %v125 = vunpack.c.h.b16 %v80
    %v126 = vunpack.c.l.b16 %v81
    %v127 = vunpack.c.h.b16 %v81
    %v128 = vpack.c.b16 %v116, %v112
    %v129 = vpack.c.b16 %v117, %v113
    %v130 = vpack.c.b16 %v118, %v114
    %v131 = vpack.c.b16 %v119, %v115
    %v132 = vpack.c.b16 %v124, %v120
    %v133 = vpack.c.b16 %v125, %v121
    %v134 = vpack.c.b16 %v126, %v122
    %v135 = vpack.c.b16 %v127, %v123
    %vm144 = vcmask 261120
    %v146 = vsel %vm144, %v73, 0
    %148 = vmatprep.subr.bf16.mxu0 %v129
    %149 = vmatpush1.bf16.msra.mxu0 %v128
    %150 = vmatprep.subr.bf16.mxu0 %v133
    %151 = vmatpush1.bf16.msra.mxu0 %v132
    %152 = vmatprep.subr.bf16.mxu0 0
    %153 = vmatpush1.bf16.msra.mxu0 0
    %154 = vmatprep.subr.bf16.mxu0 0
    %155 = vmatpush1.bf16.msra.mxu0 0
    %156 = vmatprep.subr.bf16.mxu0 0
    %157 = vmatpush1.bf16.msra.mxu0 0
    %158 = vmatprep.subr.bf16.mxu0 0
    %159 = vmatpush1.bf16.msra.mxu0 0
    %160 = vmatprep.subr.bf16.mxu0 0
    %161 = vmatpush1.bf16.msra.mxu0 0
    %162 = vmatprep.subr.bf16.mxu0 0
    %163 = vmatpush1.bf16.msra.mxu0 0
    %164 = vmatprep.subr.bf16.mxu0 0
    %165 = vmatpush1.bf16.msra.mxu0 0
    %166 = vmatprep.subr.bf16.mxu0 0
    %167 = vmatpush1.bf16.msra.mxu0 0
    %168 = vmatprep.subr.bf16.mxu0 0
    %169 = vmatpush1.bf16.msra.mxu0 0
    %170 = vmatprep.subr.bf16.mxu0 0
    %171 = vmatpush1.bf16.msra.mxu0 0
    %172 = vmatprep.subr.bf16.mxu0 0
    %173 = vmatpush1.bf16.msra.mxu0 0
    %174 = vmatprep.subr.bf16.mxu0 0
    %175 = vmatpush1.bf16.msra.mxu0 0
    %176 = vmatprep.subr.bf16.mxu0 0
    %177 = vmatpush1.bf16.msra.mxu0 0
    %178 = vmatprep.subr.bf16.mxu0 0
    %179 = vmatpush1.bf16.msra.mxu0 0
    %180 = vmatprep.mubr.bf16.mxu0 0
    %181 = vmatmul.mubr.bf16.gmra.mrb[0].mxu0 %v146
    %v182 = vpop.f32.mrb[0].mxu0
    %v183 = vadd.f32 %v87, %v182
    %v184 = vpop.f32.mrb[0].mxu0
    %v185 = vadd.f32 %v91, %v184
    %v186 = vpop.f32.mrb[0].mxu0
    %v187 = vpop.f32.mrb[0].mxu0
    %188 = vdwg.mxu0
    %189 = vmatprep.subr.bf16.mxu0 %v131
    %190 = vmatpush1.bf16.msra.mxu0 %v130
    %191 = vmatprep.subr.bf16.mxu0 %v135
    %192 = vmatpush1.bf16.msra.mxu0 %v134
    %193 = vmatprep.subr.bf16.mxu0 0
    %194 = vmatpush1.bf16.msra.mxu0 0
    %195 = vmatprep.subr.bf16.mxu0 0
    %196 = vmatpush1.bf16.msra.mxu0 0
    %197 = vmatprep.subr.bf16.mxu0 0
    %198 = vmatpush1.bf16.msra.mxu0 0
    %199 = vmatprep.subr.bf16.mxu0 0
    %200 = vmatpush1.bf16.msra.mxu0 0
    %201 = vmatprep.subr.bf16.mxu0 0
    %202 = vmatpush1.bf16.msra.mxu0 0
    %203 = vmatprep.subr.bf16.mxu0 0
    %204 = vmatpush1.bf16.msra.mxu0 0
    %205 = vmatprep.subr.bf16.mxu0 0
    %206 = vmatpush1.bf16.msra.mxu0 0
    %207 = vmatprep.subr.bf16.mxu0 0
    %208 = vmatpush1.bf16.msra.mxu0 0
    %209 = vmatprep.subr.bf16.mxu0 0
    %210 = vmatpush1.bf16.msra.mxu0 0
    %211 = vmatprep.subr.bf16.mxu0 0
    %212 = vmatpush1.bf16.msra.mxu0 0
    %213 = vmatprep.subr.bf16.mxu0 0
    %214 = vmatpush1.bf16.msra.mxu0 0
    %215 = vmatprep.subr.bf16.mxu0 0
    %216 = vmatpush1.bf16.msra.mxu0 0
    %217 = vmatprep.subr.bf16.mxu0 0
    %218 = vmatpush1.bf16.msra.mxu0 0
    %219 = vmatprep.subr.bf16.mxu0 0
    %220 = vmatpush1.bf16.msra.mxu0 0
    %221 = vmatprep.mubr.bf16.mxu0 0
    %222 = vmatmul.mubr.bf16.gmra.mrb[0].mxu0 %v146
    %v223 = vpop.f32.mrb[0].mxu0
    %v224 = vadd.f32 %v95, %v223
    %v225 = vpop.f32.mrb[0].mxu0
    %v226 = vadd.f32 %v99, %v225
    %v227 = vpop.f32.mrb[0].mxu0
    %v228 = vpop.f32.mrb[0].mxu0
    %229 = vdwg.mxu0
    %v230 = vmax.f32 %v183, 0.0
    %v231 = vmax.f32 %v185, 0.0
    %v232 = vmax.f32 %v224, 0.0
    %v233 = vmax.f32 %v226, 0.0
    %v234 = vpack.c.bf16 %v230, %v230
    %v235 = vld [vmem:[#allocation8] sm:$0xf]
    %v236 = vld [vmem:[#allocation8 + $0x4] sm:$0xf]
    %v237 = vld [vmem:[#allocation8 + $0x8] sm:$0xf]
    %v238 = vld [vmem:[#allocation8 + $0xc] sm:$0xf]
    %v239 = vld [vmem:[#allocation8 + $0x10] sm:$0xf]
    %v240 = vld [vmem:[#allocation8 + $0x14] sm:$0xf]
    %v241 = vld [vmem:[#allocation8 + $0x18] sm:$0xf]
    %v242 = vld [vmem:[#allocation8 + $0x1c] sm:$0xf]
    %v243 = vld [vmem:[#allocation8 + $0x20] sm:$0xf]
    %v244 = vld [vmem:[#allocation8 + $0x24] sm:$0xf]
    %v245 = vld [vmem:[#allocation8 + $0x28] sm:$0xf]
    %v246 = vld [vmem:[#allocation8 + $0x2c] sm:$0xf]
    %v247 = vld [vmem:[#allocation8 + $0x30] sm:$0xf]
    %v248 = vld [vmem:[#allocation8 + $0x34] sm:$0xf]
    %v249 = vld [vmem:[#allocation8 + $0x38] sm:$0xf]
    %v250 = vld [vmem:[#allocation8 + $0x3c] sm:$0xf]
    %v251 = vld [vmem:[%s4 + $0x1] sm:$0x1]
    %v252 = vlaneseq
    %v253 = vshrl.u32 %v252, 7
    %v254 = vsub.s32 0, %v253
    %v255 = vrot.slane %v251, %v254
    %v272 = vunpack.c.l.b16 %v235
    %v273 = vunpack.c.l.b16 %v236
    %v274 = vunpack.c.l.b16 %v237
    %v275 = vunpack.c.l.b16 %v238
    %v276 = vunpack.c.l.b16 %v239
    %v277 = vunpack.c.l.b16 %v240
    %v278 = vunpack.c.l.b16 %v241
    %v279 = vunpack.c.l.b16 %v242
    %v280 = vunpack.c.l.b16 %v243
    %v281 = vunpack.c.l.b16 %v244
    %v282 = vunpack.c.l.b16 %v245
    %v283 = vunpack.c.l.b16 %v246
    %v284 = vunpack.c.l.b16 %v247
    %v285 = vunpack.c.l.b16 %v248
    %v286 = vunpack.c.l.b16 %v249
    %v287 = vunpack.c.l.b16 %v250
    %v288 = vpack.c.b16 %v273, %v272
    %v289 = vpack.c.b16 %v275, %v274
    %v290 = vpack.c.b16 %v277, %v276
    %v291 = vpack.c.b16 %v279, %v278
    %v292 = vpack.c.b16 %v281, %v280
    %v293 = vpack.c.b16 %v283, %v282
    %v294 = vpack.c.b16 %v285, %v284
    %v295 = vpack.c.b16 %v287, %v286
    %304 = vmatprep.subr.bf16.mxu0 0
    %305 = vmatpush1.bf16.msra.mxu0 %v288
    %306 = vmatprep.subr.bf16.mxu0 0
    %307 = vmatpush1.bf16.msra.mxu0 %v289
    %308 = vmatprep.subr.bf16.mxu0 0
    %309 = vmatpush1.bf16.msra.mxu0 %v290
    %310 = vmatprep.subr.bf16.mxu0 0
    %311 = vmatpush1.bf16.msra.mxu0 %v291
    %312 = vmatprep.subr.bf16.mxu0 0
    %313 = vmatpush1.bf16.msra.mxu0 %v292
    %314 = vmatprep.subr.bf16.mxu0 0
    %315 = vmatpush1.bf16.msra.mxu0 %v293
    %316 = vmatprep.subr.bf16.mxu0 0
    %317 = vmatpush1.bf16.msra.mxu0 %v294
    %318 = vmatprep.subr.bf16.mxu0 0
    %319 = vmatpush1.bf16.msra.mxu0 %v295
    %320 = vmatprep.subr.bf16.mxu0 0
    %321 = vmatpush1.bf16.msra.mxu0 0
    %322 = vmatprep.subr.bf16.mxu0 0
    %323 = vmatpush1.bf16.msra.mxu0 0
    %324 = vmatprep.subr.bf16.mxu0 0
    %325 = vmatpush1.bf16.msra.mxu0 0
    %326 = vmatprep.subr.bf16.mxu0 0
    %327 = vmatpush1.bf16.msra.mxu0 0
    %328 = vmatprep.subr.bf16.mxu0 0
    %329 = vmatpush1.bf16.msra.mxu0 0
    %330 = vmatprep.subr.bf16.mxu0 0
    %331 = vmatpush1.bf16.msra.mxu0 0
    %332 = vmatprep.subr.bf16.mxu0 0
    %333 = vmatpush1.bf16.msra.mxu0 0
    %334 = vmatprep.subr.bf16.mxu0 0
    %335 = vmatpush1.bf16.msra.mxu0 0
    %336 = vmatprep.mubr.bf16.mxu0 0
    %337 = vmatmul.mubr.bf16.gmra.mrb[0].mxu0 %v234
    %v338 = vpop.f32.mrb[0].mxu0
    %v339 = vadd.f32 %v255, %v338
    %v340 = vpop.f32.mrb[0].mxu0
    %v341 = vpop.f32.mrb[0].mxu0
    %v342 = vpop.f32.mrb[0].mxu0
    %343 = vdwg.mxu0
    %v344 = vmax.f32 %v339, 0.0
    %v345 = vld [vmem:[#allocation5] sm:$0xff]
    %v346 = vadd.f32 %v344, %v345
    %347 = vst [vmem:[#allocation10] sm:$0xff] %v346
    %v348 = vpack.c.bf16 %v231, %v231
    %s349 = scalar_lea.vmem [#allocation8], 64
    %v350 = vld [vmem:[%s349] sm:$0xf]
    %v351 = vld [vmem:[%s349 + $0x4] sm:$0xf]
    %v352 = vld [vmem:[%s349 + $0x8] sm:$0xf]
    %v353 = vld [vmem:[%s349 + $0xc] sm:$0xf]
    %v354 = vld [vmem:[%s349 + $0x10] sm:$0xf]
    %v355 = vld [vmem:[%s349 + $0x14] sm:$0xf]
    %v356 = vld [vmem:[%s349 + $0x18] sm:$0xf]
    %v357 = vld [vmem:[%s349 + $0x1c] sm:$0xf]
    %v358 = vld [vmem:[%s349 + $0x20] sm:$0xf]
    %v359 = vld [vmem:[%s349 + $0x24] sm:$0xf]
    %v360 = vld [vmem:[%s349 + $0x28] sm:$0xf]
    %v361 = vld [vmem:[%s349 + $0x2c] sm:$0xf]
    %v362 = vld [vmem:[%s349 + $0x30] sm:$0xf]
    %v363 = vld [vmem:[%s349 + $0x34] sm:$0xf]
    %v364 = vld [vmem:[%s349 + $0x38] sm:$0xf]
    %v365 = vld [vmem:[%s349 + $0x3c] sm:$0xf]
    %v366 = vld [vmem:[%s4 + $0x3] sm:$0x1]
    %v367 = vlaneseq
    %v368 = vshrl.u32 %v367, 7
    %v369 = vsub.s32 0, %v368
    %v370 = vrot.slane %v366, %v369
    %v387 = vunpack.c.l.b16 %v350
    %v388 = vunpack.c.l.b16 %v351
    %v389 = vunpack.c.l.b16 %v352
    %v390 = vunpack.c.l.b16 %v353
    %v391 = vunpack.c.l.b16 %v354
    %v392 = vunpack.c.l.b16 %v355
    %v393 = vunpack.c.l.b16 %v356
    %v394 = vunpack.c.l.b16 %v357
    %v395 = vunpack.c.l.b16 %v358
    %v396 = vunpack.c.l.b16 %v359
    %v397 = vunpack.c.l.b16 %v360
    %v398 = vunpack.c.l.b16 %v361
    %v399 = vunpack.c.l.b16 %v362
    %v400 = vunpack.c.l.b16 %v363
    %v401 = vunpack.c.l.b16 %v364
    %v402 = vunpack.c.l.b16 %v365
    %v403 = vpack.c.b16 %v388, %v387
    %v404 = vpack.c.b16 %v390, %v389
    %v405 = vpack.c.b16 %v392, %v391
    %v406 = vpack.c.b16 %v394, %v393
    %v407 = vpack.c.b16 %v396, %v395
    %v408 = vpack.c.b16 %v398, %v397
    %v409 = vpack.c.b16 %v400, %v399
    %v410 = vpack.c.b16 %v402, %v401
    %419 = vmatprep.subr.bf16.mxu0 0
    %420 = vmatpush1.bf16.msra.mxu0 %v403
    %421 = vmatprep.subr.bf16.mxu0 0
    %422 = vmatpush1.bf16.msra.mxu0 %v404
    %423 = vmatprep.subr.bf16.mxu0 0
    %424 = vmatpush1.bf16.msra.mxu0 %v405
    %425 = vmatprep.subr.bf16.mxu0 0
    %426 = vmatpush1.bf16.msra.mxu0 %v406
    %427 = vmatprep.subr.bf16.mxu0 0
    %428 = vmatpush1.bf16.msra.mxu0 %v407
    %429 = vmatprep.subr.bf16.mxu0 0
    %430 = vmatpush1.bf16.msra.mxu0 %v408
    %431 = vmatprep.subr.bf16.mxu0 0
    %432 = vmatpush1.bf16.msra.mxu0 %v409
    %433 = vmatprep.subr.bf16.mxu0 0
    %434 = vmatpush1.bf16.msra.mxu0 %v410
    %435 = vmatprep.subr.bf16.mxu0 0
    %436 = vmatpush1.bf16.msra.mxu0 0
    %437 = vmatprep.subr.bf16.mxu0 0
    %438 = vmatpush1.bf16.msra.mxu0 0
    %439 = vmatprep.subr.bf16.mxu0 0
    %440 = vmatpush1.bf16.msra.mxu0 0
    %441 = vmatprep.subr.bf16.mxu0 0
    %442 = vmatpush1.bf16.msra.mxu0 0
    %443 = vmatprep.subr.bf16.mxu0 0
    %444 = vmatpush1.bf16.msra.mxu0 0
    %445 = vmatprep.subr.bf16.mxu0 0
    %446 = vmatpush1.bf16.msra.mxu0 0
    %447 = vmatprep.subr.bf16.mxu0 0
    %448 = vmatpush1.bf16.msra.mxu0 0
    %449 = vmatprep.subr.bf16.mxu0 0
    %450 = vmatpush1.bf16.msra.mxu0 0
    %451 = vmatprep.mubr.bf16.mxu0 0
    %452 = vmatmul.mubr.bf16.gmra.mrb[0].mxu0 %v348
    %v453 = vpop.f32.mrb[0].mxu0
    %v454 = vadd.f32 %v370, %v453
    %v455 = vpop.f32.mrb[0].mxu0
    %v456 = vpop.f32.mrb[0].mxu0
    %v457 = vpop.f32.mrb[0].mxu0
    %458 = vdwg.mxu0
    %v459 = vmax.f32 %v454, 0.0
    %v460 = vld [vmem:[#allocation5 + $0x8] sm:$0xff]
    %v461 = vadd.f32 %v459, %v460
    %462 = vst [vmem:[#allocation10 + $0x8] sm:$0xff] %v461
    %v463 = vpack.c.bf16 %v232, %v232
    %s464 = scalar_lea.vmem [#allocation8], 128
    %v465 = vld [vmem:[%s464] sm:$0xf]
    %v466 = vld [vmem:[%s464 + $0x4] sm:$0xf]
    %v467 = vld [vmem:[%s464 + $0x8] sm:$0xf]
    %v468 = vld [vmem:[%s464 + $0xc] sm:$0xf]
    %v469 = vld [vmem:[%s464 + $0x10] sm:$0xf]
    %v470 = vld [vmem:[%s464 + $0x14] sm:$0xf]
    %v471 = vld [vmem:[%s464 + $0x18] sm:$0xf]
    %v472 = vld [vmem:[%s464 + $0x1c] sm:$0xf]
    %v473 = vld [vmem:[%s464 + $0x20] sm:$0xf]
    %v474 = vld [vmem:[%s464 + $0x24] sm:$0xf]
    %v475 = vld [vmem:[%s464 + $0x28] sm:$0xf]
    %v476 = vld [vmem:[%s464 + $0x2c] sm:$0xf]
    %v477 = vld [vmem:[%s464 + $0x30] sm:$0xf]
    %v478 = vld [vmem:[%s464 + $0x34] sm:$0xf]
    %v479 = vld [vmem:[%s464 + $0x38] sm:$0xf]
    %v480 = vld [vmem:[%s464 + $0x3c] sm:$0xf]
    %v481 = vld [vmem:[%s4 + $0x5] sm:$0x1]
    %v482 = vlaneseq
    %v483 = vshrl.u32 %v482, 7
    %v484 = vsub.s32 0, %v483
    %v485 = vrot.slane %v481, %v484
    %v502 = vunpack.c.l.b16 %v465
    %v503 = vunpack.c.l.b16 %v466
    %v504 = vunpack.c.l.b16 %v467
    %v505 = vunpack.c.l.b16 %v468
    %v506 = vunpack.c.l.b16 %v469
    %v507 = vunpack.c.l.b16 %v470
    %v508 = vunpack.c.l.b16 %v471
    %v509 = vunpack.c.l.b16 %v472
    %v510 = vunpack.c.l.b16 %v473
    %v511 = vunpack.c.l.b16 %v474
    %v512 = vunpack.c.l.b16 %v475
    %v513 = vunpack.c.l.b16 %v476
    %v514 = vunpack.c.l.b16 %v477
    %v515 = vunpack.c.l.b16 %v478
    %v516 = vunpack.c.l.b16 %v479
    %v517 = vunpack.c.l.b16 %v480
    %v518 = vpack.c.b16 %v503, %v502
    %v519 = vpack.c.b16 %v505, %v504
    %v520 = vpack.c.b16 %v507, %v506
    %v521 = vpack.c.b16 %v509, %v508
    %v522 = vpack.c.b16 %v511, %v510
    %v523 = vpack.c.b16 %v513, %v512
    %v524 = vpack.c.b16 %v515, %v514
    %v525 = vpack.c.b16 %v517, %v516
    %534 = vmatprep.subr.bf16.mxu0 0
    %535 = vmatpush1.bf16.msra.mxu0 %v518
    %536 = vmatprep.subr.bf16.mxu0 0
    %537 = vmatpush1.bf16.msra.mxu0 %v519
    %538 = vmatprep.subr.bf16.mxu0 0
    %539 = vmatpush1.bf16.msra.mxu0 %v520
    %540 = vmatprep.subr.bf16.mxu0 0
    %541 = vmatpush1.bf16.msra.mxu0 %v521
    %542 = vmatprep.subr.bf16.mxu0 0
    %543 = vmatpush1.bf16.msra.mxu0 %v522
    %544 = vmatprep.subr.bf16.mxu0 0
    %545 = vmatpush1.bf16.msra.mxu0 %v523
    %546 = vmatprep.subr.bf16.mxu0 0
    %547 = vmatpush1.bf16.msra.mxu0 %v524
    %548 = vmatprep.subr.bf16.mxu0 0
    %549 = vmatpush1.bf16.msra.mxu0 %v525
    %550 = vmatprep.subr.bf16.mxu0 0
    %551 = vmatpush1.bf16.msra.mxu0 0
    %552 = vmatprep.subr.bf16.mxu0 0
    %553 = vmatpush1.bf16.msra.mxu0 0
    %554 = vmatprep.subr.bf16.mxu0 0
    %555 = vmatpush1.bf16.msra.mxu0 0
    %556 = vmatprep.subr.bf16.mxu0 0
    %557 = vmatpush1.bf16.msra.mxu0 0
    %558 = vmatprep.subr.bf16.mxu0 0
    %559 = vmatpush1.bf16.msra.mxu0 0
    %560 = vmatprep.subr.bf16.mxu0 0
    %561 = vmatpush1.bf16.msra.mxu0 0
    %562 = vmatprep.subr.bf16.mxu0 0
    %563 = vmatpush1.bf16.msra.mxu0 0
    %564 = vmatprep.subr.bf16.mxu0 0
    %565 = vmatpush1.bf16.msra.mxu0 0
    %566 = vmatprep.mubr.bf16.mxu0 0
    %567 = vmatmul.mubr.bf16.gmra.mrb[0].mxu0 %v463
    %v568 = vpop.f32.mrb[0].mxu0
    %v569 = vadd.f32 %v485, %v568
    %v570 = vpop.f32.mrb[0].mxu0
    %v571 = vpop.f32.mrb[0].mxu0
    %v572 = vpop.f32.mrb[0].mxu0
    %573 = vdwg.mxu0
    %v574 = vmax.f32 %v569, 0.0
    %v575 = vld [vmem:[#allocation5 + $0x10] sm:$0xff]
    %v576 = vadd.f32 %v574, %v575
    %577 = vst [vmem:[#allocation10 + $0x10] sm:$0xff] %v576
    %v578 = vpack.c.bf16 %v233, %v233
    %s579 = scalar_lea.vmem [#allocation8], 192
    %v580 = vld [vmem:[%s579] sm:$0xf]
    %v581 = vld [vmem:[%s579 + $0x4] sm:$0xf]
    %v582 = vld [vmem:[%s579 + $0x8] sm:$0xf]
    %v583 = vld [vmem:[%s579 + $0xc] sm:$0xf]
    %v584 = vld [vmem:[%s579 + $0x10] sm:$0xf]
    %v585 = vld [vmem:[%s579 + $0x14] sm:$0xf]
    %v586 = vld [vmem:[%s579 + $0x18] sm:$0xf]
    %v587 = vld [vmem:[%s579 + $0x1c] sm:$0xf]
    %v588 = vld [vmem:[%s579 + $0x20] sm:$0xf]
    %v589 = vld [vmem:[%s579 + $0x24] sm:$0xf]
    %v590 = vld [vmem:[%s579 + $0x28] sm:$0xf]
    %v591 = vld [vmem:[%s579 + $0x2c] sm:$0xf]
    %v592 = vld [vmem:[%s579 + $0x30] sm:$0xf]
    %v593 = vld [vmem:[%s579 + $0x34] sm:$0xf]
    %v594 = vld [vmem:[%s579 + $0x38] sm:$0xf]
    %v595 = vld [vmem:[%s579 + $0x3c] sm:$0xf]
    %v596 = vld [vmem:[%s4 + $0x7] sm:$0x1]
    %v597 = vlaneseq
    %v598 = vshrl.u32 %v597, 7
    %v599 = vsub.s32 0, %v598
    %v600 = vrot.slane %v596, %v599
    %v617 = vunpack.c.l.b16 %v580
    %v618 = vunpack.c.l.b16 %v581
    %v619 = vunpack.c.l.b16 %v582
    %v620 = vunpack.c.l.b16 %v583
    %v621 = vunpack.c.l.b16 %v584
    %v622 = vunpack.c.l.b16 %v585
    %v623 = vunpack.c.l.b16 %v586
    %v624 = vunpack.c.l.b16 %v587
    %v625 = vunpack.c.l.b16 %v588
    %v626 = vunpack.c.l.b16 %v589
    %v627 = vunpack.c.l.b16 %v590
    %v628 = vunpack.c.l.b16 %v591
    %v629 = vunpack.c.l.b16 %v592
    %v630 = vunpack.c.l.b16 %v593
    %v631 = vunpack.c.l.b16 %v594
    %v632 = vunpack.c.l.b16 %v595
    %v633 = vpack.c.b16 %v618, %v617
    %v634 = vpack.c.b16 %v620, %v619
    %v635 = vpack.c.b16 %v622, %v621
    %v636 = vpack.c.b16 %v624, %v623
    %v637 = vpack.c.b16 %v626, %v625
    %v638 = vpack.c.b16 %v628, %v627
    %v639 = vpack.c.b16 %v630, %v629
    %v640 = vpack.c.b16 %v632, %v631
    %649 = vmatprep.subr.bf16.mxu0 0
    %650 = vmatpush1.bf16.msra.mxu0 %v633
    %651 = vmatprep.subr.bf16.mxu0 0
    %652 = vmatpush1.bf16.msra.mxu0 %v634
    %653 = vmatprep.subr.bf16.mxu0 0
    %654 = vmatpush1.bf16.msra.mxu0 %v635
    %655 = vmatprep.subr.bf16.mxu0 0
    %656 = vmatpush1.bf16.msra.mxu0 %v636
    %657 = vmatprep.subr.bf16.mxu0 0
    %658 = vmatpush1.bf16.msra.mxu0 %v637
    %659 = vmatprep.subr.bf16.mxu0 0
    %660 = vmatpush1.bf16.msra.mxu0 %v638
    %661 = vmatprep.subr.bf16.mxu0 0
    %662 = vmatpush1.bf16.msra.mxu0 %v639
    %663 = vmatprep.subr.bf16.mxu0 0
    %664 = vmatpush1.bf16.msra.mxu0 %v640
    %665 = vmatprep.subr.bf16.mxu0 0
    %666 = vmatpush1.bf16.msra.mxu0 0
    %667 = vmatprep.subr.bf16.mxu0 0
    %668 = vmatpush1.bf16.msra.mxu0 0
    %669 = vmatprep.subr.bf16.mxu0 0
    %670 = vmatpush1.bf16.msra.mxu0 0
    %671 = vmatprep.subr.bf16.mxu0 0
    %672 = vmatpush1.bf16.msra.mxu0 0
    %673 = vmatprep.subr.bf16.mxu0 0
    %674 = vmatpush1.bf16.msra.mxu0 0
    %675 = vmatprep.subr.bf16.mxu0 0
    %676 = vmatpush1.bf16.msra.mxu0 0
    %677 = vmatprep.subr.bf16.mxu0 0
    %678 = vmatpush1.bf16.msra.mxu0 0
    %679 = vmatprep.subr.bf16.mxu0 0
    %680 = vmatpush1.bf16.msra.mxu0 0
    %681 = vmatprep.mubr.bf16.mxu0 0
    %682 = vmatmul.mubr.bf16.gmra.mrb[0].mxu0 %v578
    %v683 = vpop.f32.mrb[0].mxu0
    %v684 = vadd.f32 %v600, %v683
    %v685 = vpop.f32.mrb[0].mxu0
    %v686 = vpop.f32.mrb[0].mxu0
    %v687 = vpop.f32.mrb[0].mxu0
    %688 = vdwg.mxu0
    %v689 = vmax.f32 %v684, 0.0
    %v690 = vld [vmem:[#allocation5 + $0x18] sm:$0xff]
    %v691 = vadd.f32 %v689, %v690
    %692 = vst [vmem:[#allocation10 + $0x18] sm:$0xff] %v691
    // Predicated region
    $region38: #{tpu_custom_call.1} parent=1 // pred_check
      _
    $region39: #{tpu_custom_call.1} parent=1 // pred_check_branch
      %694 = sbr.rel (0) target = $region41
    $region40: #{tpu_custom_call.1} parent=1 // pred_region
      %s696 = ssub.s32 512, 512
      %697 = vsyncadd [#allocation4], %s696
      %s699 = sshll.u32 [#allocation10], 4
      %s700 = int_to_ptr.vmem [resolvable:$true] %s699
      %702 = dma.vmem_to_hbm [thread:$0]  %s700, 512, %s5, [#allocation4]
    $region41: #{tpu_custom_call.1} parent=1 // pred_fallthru
      _
    // Predicated region
    $region42: #{tpu_custom_call.1} parent=1 // pred_check
      _
    $region43: #{tpu_custom_call.1} parent=1 // pred_check_branch
      %704 = sbr.rel (0) target = $region45
    $region44: #{tpu_custom_call.1} parent=1 // pred_region
      %705 = dma.done [#allocation4], 512
    $region45: #{tpu_custom_call.1} parent=1 // pred_fallthru
      _
    %706 = vsyncpa [#allocation3], 1
    %707 = vsyncpa [#allocation6], 1
    %708 = vsyncpa [#allocation9], 1
    %709 = vsyncpa [#allocation4], 1

</llo_original>
